<compile_context>
chip_gen: v5e
topology: v5e:2x2
jax: 0.10.0
libtpu: 0.0.40
codegen_flags: <defaults>
</compile_context>

<pallas_src>
import jax
import jax.numpy as jnp
import numpy as np
from jax.experimental import pallas as pl
from jax.experimental.pallas import tpu as pltpu

# Small hyperparameters consistent with EncoderLayer(d_model, num_heads, dff)
B = 2
S = 8
D_MODEL = 32
NUM_HEADS = 4
DFF = 64
DEPTH = D_MODEL // NUM_HEADS
EPS = 1e-6
BS = B * S
HBS = NUM_HEADS * BS   # heads stacked along sublanes


def encoder_layer_kernel(x_ref, mask_ref, wa_ref, wo_ref, w2_ref, vec_ref, out_ref):
    x = x_ref[...]                                   # (BS, D)        = (16, 32)
    wa = wa_ref[...]                                 # (D, 2D + DFF)  = (32, 128)

    # Packed bias / LayerNorm rows (zero-padded to DFF lanes).
    bqk = vec_ref[0:1, :]                            # (1, 2D)  [bq | bk]
    bo  = vec_ref[1:2, 0:D_MODEL]
    b1  = vec_ref[2:3, :]                            # (1, DFF)
    b2  = vec_ref[3:4, 0:D_MODEL]
    g1  = vec_ref[4:5, 0:D_MODEL]
    bt1 = vec_ref[5:6, 0:D_MODEL]
    g2  = vec_ref[6:7, 0:D_MODEL]
    bt2 = vec_ref[7:8, 0:D_MODEL]

    # ---- fused Q/K projection (V == Q, reference quirk): 1 MXU op ----------
    # wa lanes [0:64] = [wq | wk]  (inside one 128-lane tile -> zero-cost slice)
    qk = jnp.dot(x, wa[:, 0:2 * D_MODEL],
                 preferred_element_type=jnp.float32) + bqk          # (16, 64)

    # ---- stack heads along sublanes: (HBS, DEPTH) = (64, 8) ----------------
    qs = jnp.concatenate(
        [qk[:, h * DEPTH:(h + 1) * DEPTH] for h in range(NUM_HEADS)], axis=0)
    ks = jnp.concatenate(
        [qk[:, D_MODEL + h * DEPTH:D_MODEL + (h + 1) * DEPTH]
         for h in range(NUM_HEADS)], axis=0)

    # ---- all heads' logits in ONE matmul, masked softmax -------------------
    scale = jnp.float32(1.0 / np.sqrt(DEPTH))
    logits = jax.lax.dot_general(
        qs, ks, (((1,), (1,)), ((), ())),
        preferred_element_type=jnp.float32) * scale                 # (64, 64)
    logits = logits + mask_ref[...]      # precomputed block mask + padding

    m = jnp.max(logits, axis=-1, keepdims=True)
    p = jnp.exp(logits - m)
    l = jnp.sum(p, axis=-1, keepdims=True)                          # (64, 1)

    # PV in ONE matmul (V == Q); normalize after PV (reciprocal * context).
    ctx_s = jnp.dot(p, qs, preferred_element_type=jnp.float32)      # (64, 8)
    ctx_s = ctx_s * pl.reciprocal(l, approx=False)

    # ---- un-stack heads back onto lanes, ONE output projection -------------
    ctx = jnp.concatenate(
        [ctx_s[h * BS:(h + 1) * BS, :] for h in range(NUM_HEADS)], axis=1)  # (16, 32)
    attn = jnp.dot(ctx, wo_ref[...], preferred_element_type=jnp.float32) + bo
    # dropout1: identity (inference)

    # ---- residual + LayerNorm 1 ---------------------------------------------
    y1 = x + attn
    mu1 = jnp.mean(y1, axis=-1, keepdims=True)
    var1 = jnp.mean((y1 - mu1) ** 2, axis=-1, keepdims=True)
    out1 = (y1 - mu1) * jax.lax.rsqrt(var1 + EPS) * g1 + bt1

    # ---- point-wise feed-forward --------------------------------------------
    # wa lanes [64:128] = w1  (inside the same 128-lane tile -> zero-cost slice)
    h1 = jnp.maximum(
        jnp.dot(out1, wa[:, 2 * D_MODEL:2 * D_MODEL + DFF],
                preferred_element_type=jnp.float32) + b1, 0.0)
    ffn = jnp.dot(h1, w2_ref[...], preferred_element_type=jnp.float32) + b2
    # dropout2: identity (inference)

    # ---- residual + LayerNorm 2 ---------------------------------------------
    y2 = out1 + ffn
    mu2 = jnp.mean(y2, axis=-1, keepdims=True)
    var2 = jnp.mean((y2 - mu2) ** 2, axis=-1, keepdims=True)
    out_ref[...] = (y2 - mu2) * jax.lax.rsqrt(var2 + EPS) * g2 + bt2


def pack_params(p):
    """One-time, host-side parameter packing (hoisted out of the call path)."""
    # Weight slab: [wq | wk | w1] -> (32, 128); every sub-weight lives inside
    # a single 128-lane tile so in-kernel slices are zero-cost views.
    wa = np.concatenate([np.asarray(p["wq"]), np.asarray(p["wk"]),
                         np.asarray(p["w1"])], axis=1).astype(np.float32)

    vec = np.zeros((8, DFF), np.float32)
    vec[0, :D_MODEL] = np.asarray(p["bq"]); vec[0, D_MODEL:] = np.asarray(p["bk"])
    vec[1, :D_MODEL] = np.asarray(p["bo"])
    vec[2, :] = np.asarray(p["b1"])
    vec[3, :D_MODEL] = np.asarray(p["b2"])
    vec[4, :D_MODEL] = np.asarray(p["g1"])
    vec[5, :D_MODEL] = np.asarray(p["beta1"])
    vec[6, :D_MODEL] = np.asarray(p["g2"])
    vec[7, :D_MODEL] = np.asarray(p["beta2"])

    # Constant block mask for the sublane-stacked (64, 64) logits:
    # row/col index = head*BS + batch*S + seq; allow only same head AND batch.
    idx = np.arange(HBS)
    head = idx // BS
    batch = (idx % BS) // S
    same = (head[:, None] == head[None, :]) & (batch[:, None] == batch[None, :])
    blockmask = np.where(same, 0.0, -1e30).astype(np.float32)

    return dict(
        wa=jnp.asarray(wa),
        wo=jnp.asarray(p["wo"], jnp.float32),
        w2=jnp.asarray(p["w2"], jnp.float32),
        vec=jnp.asarray(vec),
        blockmask=jnp.asarray(blockmask),
    )


@jax.jit
def encoder_layer(x, mask, packed):
    x2d = x.reshape(BS, D_MODEL)
    # Per-call padding row (tiny: 64 floats), combined with the constant block
    # mask so the kernel sees a single ready-made additive mask operand.
    pad_row = jnp.tile(mask.reshape(1, BS).astype(jnp.float32),
                       (1, NUM_HEADS)) * jnp.float32(-1e9)           # (1, 64)
    add_mask = packed["blockmask"] + pad_row                         # (64, 64)

    vmem = pl.BlockSpec(memory_space=pltpu.MemorySpace.VMEM)
    out2d = pl.pallas_call(
        encoder_layer_kernel,
        out_shape=jax.ShapeDtypeStruct((BS, D_MODEL), jnp.float32),
        in_specs=[vmem] * 6,
        out_specs=vmem,
    )(x2d, add_mask, packed["wa"], packed["wo"], packed["w2"], packed["vec"])
    return out2d.reshape(B, S, D_MODEL)


def init_params(key):
    ks = jax.random.split(key, 12)

    def u(k, shape, fan_in):
        bound = 1.0 / np.sqrt(fan_in)
        return jax.random.uniform(k, shape, jnp.float32, -bound, bound)

    # Linear weights stored pre-transposed as (in, out) so the kernel does x @ W.
    return dict(
        wq=u(ks[0], (D_MODEL, D_MODEL), D_MODEL), bq=u(ks[1], (D_MODEL,), D_MODEL),
        wk=u(ks[2], (D_MODEL, D_MODEL), D_MODEL), bk=u(ks[3], (D_MODEL,), D_MODEL),
        # wv/bv exist in the module but are unused in forward (reference uses wq for V)
        wv=u(ks[4], (D_MODEL, D_MODEL), D_MODEL), bv=u(ks[5], (D_MODEL,), D_MODEL),
        wo=u(ks[6], (D_MODEL, D_MODEL), D_MODEL), bo=u(ks[7], (D_MODEL,), D_MODEL),
        w1=u(ks[8], (D_MODEL, DFF), D_MODEL),     b1=u(ks[9], (DFF,), D_MODEL),
        w2=u(ks[10], (DFF, D_MODEL), DFF),        b2=u(ks[11], (D_MODEL,), DFF),
        g1=jnp.ones((D_MODEL,), jnp.float32),     beta1=jnp.zeros((D_MODEL,), jnp.float32),
        g2=jnp.ones((D_MODEL,), jnp.float32),     beta2=jnp.zeros((D_MODEL,), jnp.float32),
    )


def ref_forward(x, mask, p):
    """Pure-JAX reference mirroring the PyTorch module semantics."""
    def ln(y, g, b):
        mu = jnp.mean(y, axis=-1, keepdims=True)
        var = jnp.mean((y - mu) ** 2, axis=-1, keepdims=True)
        return (y - mu) / jnp.sqrt(var + EPS) * g + b

    q = x @ p["wq"] + p["bq"]
    k = x @ p["wk"] + p["bk"]
    v = x @ p["wq"] + p["bq"]           # faithful to reference (wq used for V)

    def split(t):
        return t.reshape(B, S, NUM_HEADS, DEPTH).transpose(0, 2, 1, 3)

    qh, kh, vh = split(q), split(k), split(v)
    logits = jnp.einsum("bhqd,bhkd->bhqk", qh, kh) / jnp.sqrt(jnp.float32(DEPTH))
    logits = logits + mask * (-1.0e9)            # (B,1,1,S) broadcast
    w = jax.nn.softmax(logits, axis=-1)
    attn = jnp.einsum("bhqk,bhkd->bhqd", w, vh).transpose(0, 2, 1, 3).reshape(B, S, D_MODEL)
    attn_out = attn @ p["wo"] + p["bo"]
    out1 = ln(x + attn_out, p["g1"], p["beta1"])
    ffn = jnp.maximum(out1 @ p["w1"] + p["b1"], 0.0) @ p["w2"] + p["b2"]
    return ln(out1 + ffn, p["g2"], p["beta2"])


if __name__ == "__main__":
    key = jax.random.PRNGKey(0)
    pkey, xkey = jax.random.split(key)
    params = init_params(pkey)
    packed = pack_params(params)       # one-time packing, outside the jitted path
    x = jax.random.normal(xkey, (B, S, D_MODEL), jnp.float32)
    # Padding mask (1.0 = masked key position), PyTorch-style (B, 1, 1, S)
    mask = jnp.zeros((B, 1, 1, S), jnp.float32).at[1, 0, 0, S - 2:].set(1.0)

    out = encoder_layer(x, mask, packed)
    out = jax.block_until_ready(out)

    ref = ref_forward(x, mask, params)
    np.testing.assert_allclose(np.asarray(out), np.asarray(ref), atol=2e-5, rtol=2e-5)
    print("KERNEL_OK")
</pallas_src>

<mosaic_0001>
module attributes {stable_mosaic.version = 11 : i64} {
  func.func @encoder_layer_kernel(%arg0: memref<16x32xf32, #tpu.memory_space<vmem>>, %arg1: memref<64x64xf32, #tpu.memory_space<vmem>>, %arg2: memref<32x128xf32, #tpu.memory_space<vmem>>, %arg3: memref<32x32xf32, #tpu.memory_space<vmem>>, %arg4: memref<64x32xf32, #tpu.memory_space<vmem>>, %arg5: memref<8x64xf32, #tpu.memory_space<vmem>>, %arg6: memref<16x32xf32, #tpu.memory_space<vmem>>) attributes {dimension_semantics = [], scalar_prefetch = 0 : i64, scratch_operands = 0 : i64, tpu.core_type = #tpu.core_type<tc>} {
    %c0 = arith.constant 0 : index
    %c0_0 = arith.constant 0 : index
    %0 = vector.load %arg0[%c0, %c0_0] : memref<16x32xf32, #tpu.memory_space<vmem>>, vector<16x32xf32>
    %c0_1 = arith.constant 0 : index
    %c0_2 = arith.constant 0 : index
    %1 = vector.load %arg2[%c0_1, %c0_2] : memref<32x128xf32, #tpu.memory_space<vmem>>, vector<32x128xf32>
    %c0_3 = arith.constant 0 : index
    %c0_4 = arith.constant 0 : index
    %2 = vector.load %arg5[%c0_3, %c0_4] : memref<8x64xf32, #tpu.memory_space<vmem>>, vector<1x64xf32>
    %c1 = arith.constant 1 : index
    %c0_5 = arith.constant 0 : index
    %3 = vector.load %arg5[%c1, %c0_5] : memref<8x64xf32, #tpu.memory_space<vmem>>, vector<1x32xf32>
    %c2 = arith.constant 2 : index
    %c0_6 = arith.constant 0 : index
    %4 = vector.load %arg5[%c2, %c0_6] : memref<8x64xf32, #tpu.memory_space<vmem>>, vector<1x64xf32>
    %c3 = arith.constant 3 : index
    %c0_7 = arith.constant 0 : index
    %5 = vector.load %arg5[%c3, %c0_7] : memref<8x64xf32, #tpu.memory_space<vmem>>, vector<1x32xf32>
    %c4 = arith.constant 4 : index
    %c0_8 = arith.constant 0 : index
    %6 = vector.load %arg5[%c4, %c0_8] : memref<8x64xf32, #tpu.memory_space<vmem>>, vector<1x32xf32>
    %c5 = arith.constant 5 : index
    %c0_9 = arith.constant 0 : index
    %7 = vector.load %arg5[%c5, %c0_9] : memref<8x64xf32, #tpu.memory_space<vmem>>, vector<1x32xf32>
    %c6 = arith.constant 6 : index
    %c0_10 = arith.constant 0 : index
    %8 = vector.load %arg5[%c6, %c0_10] : memref<8x64xf32, #tpu.memory_space<vmem>>, vector<1x32xf32>
    %c7 = arith.constant 7 : index
    %c0_11 = arith.constant 0 : index
    %9 = vector.load %arg5[%c7, %c0_11] : memref<8x64xf32, #tpu.memory_space<vmem>>, vector<1x32xf32>
    %10 = vector.extract_strided_slice %1 {offsets = [0, 0], sizes = [32, 64], strides = [1, 1]} : vector<32x128xf32> to vector<32x64xf32>
    %cst = arith.constant dense<0.000000e+00> : vector<16x64xf32>
    %11 = tpu.matmul %0, %10, %cst {dimension_numbers = #tpu.dot_dimension_numbers<[1], [0], [0], [1], [0, 0, 1, 1], [], []>} : vector<16x32xf32>, vector<32x64xf32>, vector<16x64xf32> -> vector<16x64xf32>
    %12 = vector.broadcast %2 : vector<1x64xf32> to vector<16x64xf32>
    %13 = arith.addf %11, %12 : vector<16x64xf32>
    %14 = vector.extract_strided_slice %13 {offsets = [0, 0], sizes = [16, 8], strides = [1, 1]} : vector<16x64xf32> to vector<16x8xf32>
    %15 = vector.extract_strided_slice %13 {offsets = [0, 8], sizes = [16, 8], strides = [1, 1]} : vector<16x64xf32> to vector<16x8xf32>
    %16 = vector.extract_strided_slice %13 {offsets = [0, 16], sizes = [16, 8], strides = [1, 1]} : vector<16x64xf32> to vector<16x8xf32>
    %17 = vector.extract_strided_slice %13 {offsets = [0, 24], sizes = [16, 8], strides = [1, 1]} : vector<16x64xf32> to vector<16x8xf32>
    %18 = tpu.concatenate %14, %15, %16, %17 in 0 : vector<16x8xf32>, vector<16x8xf32>, vector<16x8xf32>, vector<16x8xf32> -> vector<64x8xf32>
    %19 = vector.extract_strided_slice %13 {offsets = [0, 32], sizes = [16, 8], strides = [1, 1]} : vector<16x64xf32> to vector<16x8xf32>
    %20 = vector.extract_strided_slice %13 {offsets = [0, 40], sizes = [16, 8], strides = [1, 1]} : vector<16x64xf32> to vector<16x8xf32>
    %21 = vector.extract_strided_slice %13 {offsets = [0, 48], sizes = [16, 8], strides = [1, 1]} : vector<16x64xf32> to vector<16x8xf32>
    %22 = vector.extract_strided_slice %13 {offsets = [0, 56], sizes = [16, 8], strides = [1, 1]} : vector<16x64xf32> to vector<16x8xf32>
    %23 = tpu.concatenate %19, %20, %21, %22 in 0 : vector<16x8xf32>, vector<16x8xf32>, vector<16x8xf32>, vector<16x8xf32> -> vector<64x8xf32>
    %cst_12 = arith.constant dense<0.000000e+00> : vector<64x64xf32>
    %24 = tpu.matmul %18, %23, %cst_12 {dimension_numbers = #tpu.dot_dimension_numbers<[1], [1], [0], [0], [0, 0, 1, 0], [], []>} : vector<64x8xf32>, vector<64x8xf32>, vector<64x64xf32> -> vector<64x64xf32>
    %cst_13 = arith.constant 0.353553385 : f32
    %25 = vector.broadcast %cst_13 : f32 to vector<64x64xf32>
    %26 = arith.mulf %24, %25 : vector<64x64xf32>
    %c0_14 = arith.constant 0 : index
    %c0_15 = arith.constant 0 : index
    %27 = vector.load %arg1[%c0_14, %c0_15] : memref<64x64xf32, #tpu.memory_space<vmem>>, vector<64x64xf32>
    %28 = arith.addf %26, %27 : vector<64x64xf32>
    %cst_16 = arith.constant dense<0xFF800000> : vector<64xf32>
    %29 = vector.multi_reduction <maximumf>, %28, %cst_16 [1] : vector<64x64xf32> to vector<64xf32>
    %30 = vector.shape_cast %29 : vector<64xf32> to vector<64x1xf32>
    %31 = vector.broadcast %30 : vector<64x1xf32> to vector<64x64xf32>
    %32 = arith.subf %28, %31 : vector<64x64xf32>
    %33 = math.exp %32 : vector<64x64xf32>
    %cst_17 = arith.constant dense<0.000000e+00> : vector<64xf32>
    %34 = vector.multi_reduction <add>, %33, %cst_17 [1] : vector<64x64xf32> to vector<64xf32>
    %35 = vector.shape_cast %34 : vector<64xf32> to vector<64x1xf32>
    %cst_18 = arith.constant dense<0.000000e+00> : vector<64x8xf32>
    %36 = tpu.matmul %33, %18, %cst_18 {dimension_numbers = #tpu.dot_dimension_numbers<[1], [0], [0], [1], [0, 0, 1, 1], [], []>} : vector<64x64xf32>, vector<64x8xf32>, vector<64x8xf32> -> vector<64x8xf32>
    %37 = tpu.reciprocal %35 : vector<64x1xf32> -> vector<64x1xf32>
    %38 = vector.broadcast %37 : vector<64x1xf32> to vector<64x8xf32>
    %39 = arith.mulf %36, %38 : vector<64x8xf32>
    %40 = vector.extract_strided_slice %39 {offsets = [0, 0], sizes = [16, 8], strides = [1, 1]} : vector<64x8xf32> to vector<16x8xf32>
    %41 = vector.extract_strided_slice %39 {offsets = [16, 0], sizes = [16, 8], strides = [1, 1]} : vector<64x8xf32> to vector<16x8xf32>
    %42 = vector.extract_strided_slice %39 {offsets = [32, 0], sizes = [16, 8], strides = [1, 1]} : vector<64x8xf32> to vector<16x8xf32>
    %43 = vector.extract_strided_slice %39 {offsets = [48, 0], sizes = [16, 8], strides = [1, 1]} : vector<64x8xf32> to vector<16x8xf32>
    %44 = tpu.concatenate %40, %41, %42, %43 in 1 : vector<16x8xf32>, vector<16x8xf32>, vector<16x8xf32>, vector<16x8xf32> -> vector<16x32xf32>
    %c0_19 = arith.constant 0 : index
    %c0_20 = arith.constant 0 : index
    %45 = vector.load %arg3[%c0_19, %c0_20] : memref<32x32xf32, #tpu.memory_space<vmem>>, vector<32x32xf32>
    %cst_21 = arith.constant dense<0.000000e+00> : vector<16x32xf32>
    %46 = tpu.matmul %44, %45, %cst_21 {dimension_numbers = #tpu.dot_dimension_numbers<[1], [0], [0], [1], [0, 0, 1, 1], [], []>} : vector<16x32xf32>, vector<32x32xf32>, vector<16x32xf32> -> vector<16x32xf32>
    %47 = vector.broadcast %3 : vector<1x32xf32> to vector<16x32xf32>
    %48 = arith.addf %46, %47 : vector<16x32xf32>
    %49 = arith.addf %0, %48 : vector<16x32xf32>
    %cst_22 = arith.constant dense<0.000000e+00> : vector<16xf32>
    %50 = vector.multi_reduction <add>, %49, %cst_22 [1] : vector<16x32xf32> to vector<16xf32>
    %51 = vector.shape_cast %50 : vector<16xf32> to vector<16x1xf32>
    %cst_23 = arith.constant 3.200000e+01 : f32
    %52 = vector.broadcast %cst_23 : f32 to vector<16x1xf32>
    %53 = arith.divf %51, %52 : vector<16x1xf32>
    %54 = vector.broadcast %53 : vector<16x1xf32> to vector<16x32xf32>
    %55 = arith.subf %49, %54 : vector<16x32xf32>
    %56 = arith.mulf %55, %55 : vector<16x32xf32>
    %cst_24 = arith.constant dense<0.000000e+00> : vector<16xf32>
    %57 = vector.multi_reduction <add>, %56, %cst_24 [1] : vector<16x32xf32> to vector<16xf32>
    %58 = vector.shape_cast %57 : vector<16xf32> to vector<16x1xf32>
    %cst_25 = arith.constant 3.200000e+01 : f32
    %59 = vector.broadcast %cst_25 : f32 to vector<16x1xf32>
    %60 = arith.divf %58, %59 : vector<16x1xf32>
    %61 = vector.broadcast %53 : vector<16x1xf32> to vector<16x32xf32>
    %62 = arith.subf %49, %61 : vector<16x32xf32>
    %cst_26 = arith.constant 9.99999997E-7 : f32
    %63 = vector.broadcast %cst_26 : f32 to vector<16x1xf32>
    %64 = arith.addf %60, %63 : vector<16x1xf32>
    %65 = math.rsqrt %64 : vector<16x1xf32>
    %66 = vector.broadcast %65 : vector<16x1xf32> to vector<16x32xf32>
    %67 = arith.mulf %62, %66 : vector<16x32xf32>
    %68 = vector.broadcast %6 : vector<1x32xf32> to vector<16x32xf32>
    %69 = arith.mulf %67, %68 : vector<16x32xf32>
    %70 = vector.broadcast %7 : vector<1x32xf32> to vector<16x32xf32>
    %71 = arith.addf %69, %70 : vector<16x32xf32>
    %72 = vector.extract_strided_slice %1 {offsets = [0, 64], sizes = [32, 64], strides = [1, 1]} : vector<32x128xf32> to vector<32x64xf32>
    %cst_27 = arith.constant dense<0.000000e+00> : vector<16x64xf32>
    %73 = tpu.matmul %71, %72, %cst_27 {dimension_numbers = #tpu.dot_dimension_numbers<[1], [0], [0], [1], [0, 0, 1, 1], [], []>} : vector<16x32xf32>, vector<32x64xf32>, vector<16x64xf32> -> vector<16x64xf32>
    %74 = vector.broadcast %4 : vector<1x64xf32> to vector<16x64xf32>
    %75 = arith.addf %73, %74 : vector<16x64xf32>
    %cst_28 = arith.constant 0.000000e+00 : f32
    %76 = vector.broadcast %cst_28 : f32 to vector<16x64xf32>
    %77 = arith.maximumf %75, %76 : vector<16x64xf32>
    %c0_29 = arith.constant 0 : index
    %c0_30 = arith.constant 0 : index
    %78 = vector.load %arg4[%c0_29, %c0_30] : memref<64x32xf32, #tpu.memory_space<vmem>>, vector<64x32xf32>
    %cst_31 = arith.constant dense<0.000000e+00> : vector<16x32xf32>
    %79 = tpu.matmul %77, %78, %cst_31 {dimension_numbers = #tpu.dot_dimension_numbers<[1], [0], [0], [1], [0, 0, 1, 1], [], []>} : vector<16x64xf32>, vector<64x32xf32>, vector<16x32xf32> -> vector<16x32xf32>
    %80 = vector.broadcast %5 : vector<1x32xf32> to vector<16x32xf32>
    %81 = arith.addf %79, %80 : vector<16x32xf32>
    %82 = arith.addf %71, %81 : vector<16x32xf32>
    %cst_32 = arith.constant dense<0.000000e+00> : vector<16xf32>
    %83 = vector.multi_reduction <add>, %82, %cst_32 [1] : vector<16x32xf32> to vector<16xf32>
    %84 = vector.shape_cast %83 : vector<16xf32> to vector<16x1xf32>
    %cst_33 = arith.constant 3.200000e+01 : f32
    %85 = vector.broadcast %cst_33 : f32 to vector<16x1xf32>
    %86 = arith.divf %84, %85 : vector<16x1xf32>
    %87 = vector.broadcast %86 : vector<16x1xf32> to vector<16x32xf32>
    %88 = arith.subf %82, %87 : vector<16x32xf32>
    %89 = arith.mulf %88, %88 : vector<16x32xf32>
    %cst_34 = arith.constant dense<0.000000e+00> : vector<16xf32>
    %90 = vector.multi_reduction <add>, %89, %cst_34 [1] : vector<16x32xf32> to vector<16xf32>
    %91 = vector.shape_cast %90 : vector<16xf32> to vector<16x1xf32>
    %cst_35 = arith.constant 3.200000e+01 : f32
    %92 = vector.broadcast %cst_35 : f32 to vector<16x1xf32>
    %93 = arith.divf %91, %92 : vector<16x1xf32>
    %94 = vector.broadcast %86 : vector<16x1xf32> to vector<16x32xf32>
    %95 = arith.subf %82, %94 : vector<16x32xf32>
    %cst_36 = arith.constant 9.99999997E-7 : f32
    %96 = vector.broadcast %cst_36 : f32 to vector<16x1xf32>
    %97 = arith.addf %93, %96 : vector<16x1xf32>
    %98 = math.rsqrt %97 : vector<16x1xf32>
    %99 = vector.broadcast %98 : vector<16x1xf32> to vector<16x32xf32>
    %100 = arith.mulf %95, %99 : vector<16x32xf32>
    %101 = vector.broadcast %8 : vector<1x32xf32> to vector<16x32xf32>
    %102 = arith.mulf %100, %101 : vector<16x32xf32>
    %103 = vector.broadcast %9 : vector<1x32xf32> to vector<16x32xf32>
    %104 = arith.addf %102, %103 : vector<16x32xf32>
    %c0_37 = arith.constant 0 : index
    %c0_38 = arith.constant 0 : index
    %105 = vector.load %arg6[%c0_37, %c0_38] : memref<16x32xf32, #tpu.memory_space<vmem>>, vector<16x32xf32>
    tpu.vector_store %arg6[%c0_37, %c0_38], %104 {strides = array<i32>} : memref<16x32xf32, #tpu.memory_space<vmem>>, vector<16x32xf32>,
    return
  }
}

</mosaic_0001>

<llo_original>
// kernel: encoder_layer.1
$region0: #{encoder_layer.1}
  #allocation0 [shape = 'u32[]', space=smem, size = 0x4, offset = 0x4, fixed_abs, tag = 'smem constant byte address 0x4 - core index']
  #allocation1 [shape = 'u32[72,128]{1,0:T(1,128)}', space=vmem, size = 0x9000, scoped, tag = 'internal scratch']
  %s0 = inlined_call_operand.vmem [shape: f32[16,32], index: 0, kind: input, shape index: {}]
  %s1 = inlined_call_operand.vmem [shape: f32[64,64], index: 1, kind: input, shape index: {}]
  %s2 = inlined_call_operand.vmem [shape: f32[32,128], index: 2, kind: input, shape index: {}]
  %s3 = inlined_call_operand.vmem [shape: f32[32,32], index: 3, kind: input, shape index: {}]
  %s4 = inlined_call_operand.vmem [shape: f32[64,32], index: 4, kind: input, shape index: {}]
  %s5 = inlined_call_operand.vmem [shape: f32[8,64], index: 5, kind: input, shape index: {}]
  %s6 = inlined_call_operand.hbm [shape: f32[16,32], index: 6, kind: output, shape index: {}]
  %s7 = sld [smem:[#allocation0]]
  $region34: #{encoder_layer.1} parent=0
    _
  %s9 = ssub.s32 1, %s7
  %s10 = scalar_select 0, %s9, %s7
  $region1: #{encoder_layer.1} parent=0
    #allocation2 [shape = 'u8[8192]{0}', space=vmem, size = 0x2000, scoped, tag = 'output window, operand 0, single buffered']
    #allocation3 [shape = 's32[1]{0}', space=sflag, size = 0x4, scoped, tag = 'scoped memory for encoder_layer.1']
    %11 = vsyncpa [#allocation3], 0
    // Predicated region
    $region2: #{encoder_layer.1} parent=1 // pred_check
      _
    $region3: #{encoder_layer.1} parent=1 // pred_check_branch
      %13 = sbr.rel (0) target = $region5
    $region4: #{encoder_layer.1} parent=1 // pred_region
      _
    $region5: #{encoder_layer.1} parent=1 // pred_fallthru
      _
    // Predicated region
    $region6: #{encoder_layer.1} parent=1 // pred_check
      _
    $region7: #{encoder_layer.1} parent=1 // pred_check_branch
      %15 = sbr.rel (0) target = $region9
    $region8: #{encoder_layer.1} parent=1 // pred_region
      _
    $region9: #{encoder_layer.1} parent=1 // pred_fallthru
      _
    // Predicated region
    $region10: #{encoder_layer.1} parent=1 // pred_check
      _
    $region11: #{encoder_layer.1} parent=1 // pred_check_branch
      %17 = sbr.rel (0) target = $region13
    $region12: #{encoder_layer.1} parent=1 // pred_region
      _
    $region13: #{encoder_layer.1} parent=1 // pred_fallthru
      _
    // Predicated region
    $region14: #{encoder_layer.1} parent=1 // pred_check
      _
    $region15: #{encoder_layer.1} parent=1 // pred_check_branch
      %19 = sbr.rel (0) target = $region17
    $region16: #{encoder_layer.1} parent=1 // pred_region
      _
    $region17: #{encoder_layer.1} parent=1 // pred_fallthru
      _
    // Predicated region
    $region18: #{encoder_layer.1} parent=1 // pred_check
      _
    $region19: #{encoder_layer.1} parent=1 // pred_check_branch
      %21 = sbr.rel (0) target = $region21
    $region20: #{encoder_layer.1} parent=1 // pred_region
      _
    $region21: #{encoder_layer.1} parent=1 // pred_fallthru
      _
    // Predicated region
    $region22: #{encoder_layer.1} parent=1 // pred_check
      _
    $region23: #{encoder_layer.1} parent=1 // pred_check_branch
      %23 = sbr.rel (0) target = $region25
    $region24: #{encoder_layer.1} parent=1 // pred_region
      _
    $region25: #{encoder_layer.1} parent=1 // pred_fallthru
      _
    %v24 = vld [vmem:[%s0] sm:$0xff]
    %v25 = vld [vmem:[%s0 + $0x8] sm:$0xff]
    %v26 = vld [vmem:[%s2] sm:$0xff]
    %v27 = vld [vmem:[%s2 + $0x8] sm:$0xff]
    %v28 = vld [vmem:[%s2 + $0x10] sm:$0xff]
    %v29 = vld [vmem:[%s2 + $0x18] sm:$0xff]
    %v30 = vld [vmem:[%s5] sm:$0x1]
    %v31 = vld [vmem:[%s5 + $0x1] sm:$0x1]
    %v32 = vld [vmem:[%s5 + $0x2] sm:$0x1]
    %v33 = vld [vmem:[%s5 + $0x3] sm:$0x1]
    %v34 = vld [vmem:[%s5 + $0x4] sm:$0x1]
    %v35 = vld [vmem:[%s5 + $0x5] sm:$0x1]
    %v36 = vld [vmem:[%s5 + $0x6] sm:$0x1]
    %v37 = vld [vmem:[%s5 + $0x7] sm:$0x1]
    %v38 = vperm.slane %v30, 0
    %vm39 = vcmask 261120
    %v41 = vsel %vm39, %v24, 0
    %v44 = vsel %vm39, %v25, 0
    %46 = vmatpush.msra.mxu0 0.0
    %47 = vmatpush.msra.mxu0 0.0
    %48 = vmatpush.msra.mxu0 0.0
    %49 = vmatpush.msra.mxu0 0.0
    %50 = vmatpush.msra.mxu0 0.0
    %51 = vmatpush.msra.mxu0 0.0
    %52 = vmatpush.msra.mxu0 0.0
    %53 = vmatpush.msra.mxu0 0.0
    %54 = vmatpush.msra.mxu0 0.0
    %55 = vmatpush.msra.mxu0 0.0
    %56 = vmatpush.msra.mxu0 0.0
    %57 = vmatpush.msra.mxu0 0.0
    %58 = vmatpush.msra.mxu0 %v29
    %59 = vmatpush.msra.mxu0 %v28
    %60 = vmatpush.msra.mxu0 %v27
    %61 = vmatpush.msra.mxu0 %v26
    %62 = vmatmul.f32.gmra.mxu0 %v41
    %v63 = vpop.f32.mrf.mxu0
    %v64 = vadd.f32 %v38, %v63
    %65 = vmatmul.f32.gmra.mxu0 %v44
    %v66 = vpop.f32.mrf.mxu0
    %v67 = vadd.f32 %v38, %v66
    %68 = vdwg.mxu0
    %71 = vrot.lane.b32.xlu0 %v64, 120
    %v72 = vpop.permute.xlu0 %71
    %73 = vrot.lane.b32.xlu0 %v67, 120
    %v74 = vpop.permute.xlu0 %73
    %77 = vrot.lane.b32.xlu0 %v64, 112
    %v78 = vpop.permute.xlu0 %77
    %79 = vrot.lane.b32.xlu0 %v67, 112
    %v80 = vpop.permute.xlu0 %79
    %83 = vrot.lane.b32.xlu0 %v64, 104
    %v84 = vpop.permute.xlu0 %83
    %85 = vrot.lane.b32.xlu0 %v67, 104
    %v86 = vpop.permute.xlu0 %85
    %89 = vrot.lane.b32.xlu0 %v64, 96
    %v90 = vpop.permute.xlu0 %89
    %91 = vrot.lane.b32.xlu0 %v67, 96
    %v92 = vpop.permute.xlu0 %91
    %93 = vrot.lane.b32.xlu0 %v72, 96
    %v94 = vpop.permute.xlu0 %93
    %95 = vrot.lane.b32.xlu0 %v74, 96
    %v96 = vpop.permute.xlu0 %95
    %97 = vrot.lane.b32.xlu0 %v78, 96
    %v98 = vpop.permute.xlu0 %97
    %99 = vrot.lane.b32.xlu0 %v80, 96
    %v100 = vpop.permute.xlu0 %99
    %101 = vrot.lane.b32.xlu0 %v84, 96
    %v102 = vpop.permute.xlu0 %101
    %103 = vrot.lane.b32.xlu0 %v86, 96
    %v104 = vpop.permute.xlu0 %103
    %vm105 = vcmask 64512
    %v106 = vsel %vm105, %v64, 0
    %v108 = vsel %vm105, %v67, 0
    %v110 = vsel %vm105, %v72, 0
    %v112 = vsel %vm105, %v74, 0
    %v114 = vsel %vm105, %v78, 0
    %v116 = vsel %vm105, %v80, 0
    %v118 = vsel %vm105, %v84, 0
    %v120 = vsel %vm105, %v86, 0
    %v122 = vsel %vm105, %v90, 0
    %v124 = vsel %vm105, %v92, 0
    %v126 = vsel %vm105, %v94, 0
    %v128 = vsel %vm105, %v96, 0
    %v130 = vsel %vm105, %v98, 0
    %v132 = vsel %vm105, %v100, 0
    %v134 = vsel %vm105, %v102, 0
    %v136 = vsel %vm105, %v104, 0
    %138 = vmatpush.xpose.msra.mxu0 0.0
    %139 = vmatpush.xpose.msra.mxu0 0.0
    %140 = vmatpush.xpose.msra.mxu0 0.0
    %141 = vmatpush.xpose.msra.mxu0 0.0
    %142 = vmatpush.xpose.msra.mxu0 0.0
    %143 = vmatpush.xpose.msra.mxu0 0.0
    %144 = vmatpush.xpose.msra.mxu0 0.0
    %145 = vmatpush.xpose.msra.mxu0 0.0
    %146 = vmatpush.xpose.msra.mxu0 %v136
    %147 = vmatpush.xpose.msra.mxu0 %v134
    %148 = vmatpush.xpose.msra.mxu0 %v132
    %149 = vmatpush.xpose.msra.mxu0 %v130
    %150 = vmatpush.xpose.msra.mxu0 %v128
    %151 = vmatpush.xpose.msra.mxu0 %v126
    %152 = vmatpush.xpose.msra.mxu0 %v124
    %153 = vmatpush.xpose.msra.mxu0 %v122
    %154 = vmatmul.f32.gmra.mxu0 %v106
    %v155 = vpop.f32.mrf.mxu0
    %v156 = vadd.f32 0.0, %v155
    %157 = vmatmul.f32.gmra.mxu0 %v108
    %v158 = vpop.f32.mrf.mxu0
    %v159 = vadd.f32 0.0, %v158
    %160 = vmatmul.f32.gmra.mxu0 %v110
    %v161 = vpop.f32.mrf.mxu0
    %v162 = vadd.f32 0.0, %v161
    %163 = vmatmul.f32.gmra.mxu0 %v112
    %v164 = vpop.f32.mrf.mxu0
    %v165 = vadd.f32 0.0, %v164
    %166 = vmatmul.f32.gmra.mxu0 %v114
    %v167 = vpop.f32.mrf.mxu0
    %v168 = vadd.f32 0.0, %v167
    %169 = vmatmul.f32.gmra.mxu0 %v116
    %v170 = vpop.f32.mrf.mxu0
    %v171 = vadd.f32 0.0, %v170
    %172 = vmatmul.f32.gmra.mxu0 %v118
    %v173 = vpop.f32.mrf.mxu0
    %v174 = vadd.f32 0.0, %v173
    %175 = vmatmul.f32.gmra.mxu0 %v120
    %v176 = vpop.f32.mrf.mxu0
    %v177 = vadd.f32 0.0, %v176
    %178 = vdwg.mxu0
    %v179 = vmul.f32 %v156, 0.35355338
    %v180 = vmul.f32 %v159, 0.35355338
    %v181 = vmul.f32 %v162, 0.35355338
    %v182 = vmul.f32 %v165, 0.35355338
    %v183 = vmul.f32 %v168, 0.35355338
    %v184 = vmul.f32 %v171, 0.35355338
    %v185 = vmul.f32 %v174, 0.35355338
    %v186 = vmul.f32 %v177, 0.35355338
    %v187 = vld [vmem:[%s1] sm:$0xff]
    %v188 = vld [vmem:[%s1 + $0x8] sm:$0xff]
    %v189 = vld [vmem:[%s1 + $0x10] sm:$0xff]
    %v190 = vld [vmem:[%s1 + $0x18] sm:$0xff]
    %v191 = vld [vmem:[%s1 + $0x20] sm:$0xff]
    %v192 = vld [vmem:[%s1 + $0x28] sm:$0xff]
    %v193 = vld [vmem:[%s1 + $0x30] sm:$0xff]
    %v194 = vld [vmem:[%s1 + $0x38] sm:$0xff]
    %v195 = vadd.f32 %v179, %v187
    %v196 = vadd.f32 %v180, %v188
    %v197 = vadd.f32 %v181, %v189
    %v198 = vadd.f32 %v182, %v190
    %v199 = vadd.f32 %v183, %v191
    %v200 = vadd.f32 %v184, %v192
    %v201 = vadd.f32 %v185, %v193
    %v202 = vadd.f32 %v186, %v194
    %vm203 = vcmask 523264
    %v204 = vsel %vm203, %v195, -inf
    %205 = vmax.xlane.f32.xlu0 %v204
    %v206 = vpop.xlane.xlu0 %205
    %v207 = vsel %vm203, %v196, -inf
    %208 = vmax.xlane.f32.xlu0 %v207
    %v209 = vpop.xlane.xlu0 %208
    %v210 = vsel %vm203, %v197, -inf
    %211 = vmax.xlane.f32.xlu0 %v210
    %v212 = vpop.xlane.xlu0 %211
    %v213 = vsel %vm203, %v198, -inf
    %214 = vmax.xlane.f32.xlu0 %v213
    %v215 = vpop.xlane.xlu0 %214
    %v216 = vsel %vm203, %v199, -inf
    %217 = vmax.xlane.f32.xlu0 %v216
    %v218 = vpop.xlane.xlu0 %217
    %v219 = vsel %vm203, %v200, -inf
    %220 = vmax.xlane.f32.xlu0 %v219
    %v221 = vpop.xlane.xlu0 %220
    %v222 = vsel %vm203, %v201, -inf
    %223 = vmax.xlane.f32.xlu0 %v222
    %v224 = vpop.xlane.xlu0 %223
    %v225 = vsel %vm203, %v202, -inf
    %226 = vmax.xlane.f32.xlu0 %v225
    %v227 = vpop.xlane.xlu0 %226
    %v228 = vsub.f32 %v195, %v206
    %v229 = vsub.f32 %v196, %v209
    %v230 = vsub.f32 %v197, %v212
    %v231 = vsub.f32 %v198, %v215
    %v232 = vsub.f32 %v199, %v218
    %v233 = vsub.f32 %v200, %v221
    %v234 = vsub.f32 %v201, %v224
    %v235 = vsub.f32 %v202, %v227
    %v236 = vmul.f32 %v228, 1.442695
    %v237 = vpow.pop %v236
    %v238 = vmul.f32 %v229, 1.442695
    %v239 = vpow.pop %v238
    %v240 = vmul.f32 %v230, 1.442695
    %v241 = vpow.pop %v240
    %v242 = vmul.f32 %v231, 1.442695
    %v243 = vpow.pop %v242
    %v244 = vmul.f32 %v232, 1.442695
    %v245 = vpow.pop %v244
    %v246 = vmul.f32 %v233, 1.442695
    %v247 = vpow.pop %v246
    %v248 = vmul.f32 %v234, 1.442695
    %v249 = vpow.pop %v248
    %v250 = vmul.f32 %v235, 1.442695
    %v251 = vpow.pop %v250
    %v252 = vsel %vm203, %v237, 0.0
    %253 = vadd.xlane.f32.xlu0 %v252
    %v254 = vpop.xlane.xlu0 %253
    %v255 = vsel %vm203, %v239, 0.0
    %256 = vadd.xlane.f32.xlu0 %v255
    %v257 = vpop.xlane.xlu0 %256
    %v258 = vsel %vm203, %v241, 0.0
    %259 = vadd.xlane.f32.xlu0 %v258
    %v260 = vpop.xlane.xlu0 %259
    %v261 = vsel %vm203, %v243, 0.0
    %262 = vadd.xlane.f32.xlu0 %v261
    %v263 = vpop.xlane.xlu0 %262
    %v264 = vsel %vm203, %v245, 0.0
    %265 = vadd.xlane.f32.xlu0 %v264
    %v266 = vpop.xlane.xlu0 %265
    %v267 = vsel %vm203, %v247, 0.0
    %268 = vadd.xlane.f32.xlu0 %v267
    %v269 = vpop.xlane.xlu0 %268
    %v270 = vsel %vm203, %v249, 0.0
    %271 = vadd.xlane.f32.xlu0 %v270
    %v272 = vpop.xlane.xlu0 %271
    %v273 = vsel %vm203, %v251, 0.0
    %274 = vadd.xlane.f32.xlu0 %v273
    %v275 = vpop.xlane.xlu0 %274
    %v277 = vsel %vm203, %v237, 0
    %v280 = vsel %vm203, %v239, 0
    %v283 = vsel %vm203, %v241, 0
    %v286 = vsel %vm203, %v243, 0
    %v289 = vsel %vm203, %v245, 0
    %v292 = vsel %vm203, %v247, 0
    %v295 = vsel %vm203, %v249, 0
    %v298 = vsel %vm203, %v251, 0
    %300 = vmatpush.msra.mxu0 0.0
    %301 = vmatpush.msra.mxu0 0.0
    %302 = vmatpush.msra.mxu0 0.0
    %303 = vmatpush.msra.mxu0 0.0
    %304 = vmatpush.msra.mxu0 0.0
    %305 = vmatpush.msra.mxu0 0.0
    %306 = vmatpush.msra.mxu0 0.0
    %307 = vmatpush.msra.mxu0 0.0
    %308 = vmatpush.msra.mxu0 %v86
    %309 = vmatpush.msra.mxu0 %v84
    %310 = vmatpush.msra.mxu0 %v80
    %311 = vmatpush.msra.mxu0 %v78
    %312 = vmatpush.msra.mxu0 %v74
    %313 = vmatpush.msra.mxu0 %v72
    %314 = vmatpush.msra.mxu0 %v67
    %315 = vmatpush.msra.mxu0 %v64
    %316 = vmatmul.f32.gmra.mxu0 %v277
    %v317 = vpop.f32.mrf.mxu0
    %v318 = vadd.f32 0.0, %v317
    %319 = vmatmul.f32.gmra.mxu0 %v280
    %v320 = vpop.f32.mrf.mxu0
    %v321 = vadd.f32 0.0, %v320
    %322 = vmatmul.f32.gmra.mxu0 %v283
    %v323 = vpop.f32.mrf.mxu0
    %v324 = vadd.f32 0.0, %v323
    %325 = vmatmul.f32.gmra.mxu0 %v286
    %v326 = vpop.f32.mrf.mxu0
    %v327 = vadd.f32 0.0, %v326
    %328 = vmatmul.f32.gmra.mxu0 %v289
    %v329 = vpop.f32.mrf.mxu0
    %v330 = vadd.f32 0.0, %v329
    %331 = vmatmul.f32.gmra.mxu0 %v292
    %v332 = vpop.f32.mrf.mxu0
    %v333 = vadd.f32 0.0, %v332
    %334 = vmatmul.f32.gmra.mxu0 %v295
    %v335 = vpop.f32.mrf.mxu0
    %v336 = vadd.f32 0.0, %v335
    %337 = vmatmul.f32.gmra.mxu0 %v298
    %v338 = vpop.f32.mrf.mxu0
    %v339 = vadd.f32 0.0, %v338
    %340 = vdwg.mxu0
    %v341 = vrcp.pop %v254
    %v342 = vmul.f32 %v254, %v341
    %v343 = vsub.f32 1.0, %v342
    %v344 = vmul.f32 %v341, %v343
    %v345 = vadd.f32 %v341, %v344
    %vm346 = vweird.f32 %v254
    %vm347 = vweird.f32 %v341
    %vm348 = vmor %vm346, %vm347
    %v349 = vsel %vm348, %v341, %v345
    %v350 = vand.u32 2147483647, %v254
    %vm351 = vcmp.eq.f32.partialorder %v350, 8.507059e+37
    %v352 = vand.u32 %v254, 2147483648
    %v353 = vor.u32 1.1754944e-38, %v352
    %v354 = vsel %vm351, %v353, %v349
    %v355 = vrcp.pop %v257
    %v356 = vmul.f32 %v257, %v355
    %v357 = vsub.f32 1.0, %v356
    %v358 = vmul.f32 %v355, %v357
    %v359 = vadd.f32 %v355, %v358
    %vm360 = vweird.f32 %v257
    %vm361 = vweird.f32 %v355
    %vm362 = vmor %vm360, %vm361
    %v363 = vsel %vm362, %v355, %v359
    %v364 = vand.u32 2147483647, %v257
    %vm365 = vcmp.eq.f32.partialorder %v364, 8.507059e+37
    %v366 = vand.u32 %v257, 2147483648
    %v367 = vor.u32 1.1754944e-38, %v366
    %v368 = vsel %vm365, %v367, %v363
    %v369 = vrcp.pop %v260
    %v370 = vmul.f32 %v260, %v369
    %v371 = vsub.f32 1.0, %v370
    %v372 = vmul.f32 %v369, %v371
    %v373 = vadd.f32 %v369, %v372
    %vm374 = vweird.f32 %v260
    %vm375 = vweird.f32 %v369
    %vm376 = vmor %vm374, %vm375
    %v377 = vsel %vm376, %v369, %v373
    %v378 = vand.u32 2147483647, %v260
    %vm379 = vcmp.eq.f32.partialorder %v378, 8.507059e+37
    %v380 = vand.u32 %v260, 2147483648
    %v381 = vor.u32 1.1754944e-38, %v380
    %v382 = vsel %vm379, %v381, %v377
    %v383 = vrcp.pop %v263
    %v384 = vmul.f32 %v263, %v383
    %v385 = vsub.f32 1.0, %v384
    %v386 = vmul.f32 %v383, %v385
    %v387 = vadd.f32 %v383, %v386
    %vm388 = vweird.f32 %v263
    %vm389 = vweird.f32 %v383
    %vm390 = vmor %vm388, %vm389
    %v391 = vsel %vm390, %v383, %v387
    %v392 = vand.u32 2147483647, %v263
    %vm393 = vcmp.eq.f32.partialorder %v392, 8.507059e+37
    %v394 = vand.u32 %v263, 2147483648
    %v395 = vor.u32 1.1754944e-38, %v394
    %v396 = vsel %vm393, %v395, %v391
    %v397 = vrcp.pop %v266
    %v398 = vmul.f32 %v266, %v397
    %v399 = vsub.f32 1.0, %v398
    %v400 = vmul.f32 %v397, %v399
    %v401 = vadd.f32 %v397, %v400
    %vm402 = vweird.f32 %v266
    %vm403 = vweird.f32 %v397
    %vm404 = vmor %vm402, %vm403
    %v405 = vsel %vm404, %v397, %v401
    %v406 = vand.u32 2147483647, %v266
    %vm407 = vcmp.eq.f32.partialorder %v406, 8.507059e+37
    %v408 = vand.u32 %v266, 2147483648
    %v409 = vor.u32 1.1754944e-38, %v408
    %v410 = vsel %vm407, %v409, %v405
    %v411 = vrcp.pop %v269
    %v412 = vmul.f32 %v269, %v411
    %v413 = vsub.f32 1.0, %v412
    %v414 = vmul.f32 %v411, %v413
    %v415 = vadd.f32 %v411, %v414
    %vm416 = vweird.f32 %v269
    %vm417 = vweird.f32 %v411
    %vm418 = vmor %vm416, %vm417
    %v419 = vsel %vm418, %v411, %v415
    %v420 = vand.u32 2147483647, %v269
    %vm421 = vcmp.eq.f32.partialorder %v420, 8.507059e+37
    %v422 = vand.u32 %v269, 2147483648
    %v423 = vor.u32 1.1754944e-38, %v422
    %v424 = vsel %vm421, %v423, %v419
    %v425 = vrcp.pop %v272
    %v426 = vmul.f32 %v272, %v425
    %v427 = vsub.f32 1.0, %v426
    %v428 = vmul.f32 %v425, %v427
    %v429 = vadd.f32 %v425, %v428
    %vm430 = vweird.f32 %v272
    %vm431 = vweird.f32 %v425
    %vm432 = vmor %vm430, %vm431
    %v433 = vsel %vm432, %v425, %v429
    %v434 = vand.u32 2147483647, %v272
    %vm435 = vcmp.eq.f32.partialorder %v434, 8.507059e+37
    %v436 = vand.u32 %v272, 2147483648
    %v437 = vor.u32 1.1754944e-38, %v436
    %v438 = vsel %vm435, %v437, %v433
    %v439 = vrcp.pop %v275
    %v440 = vmul.f32 %v275, %v439
    %v441 = vsub.f32 1.0, %v440
    %v442 = vmul.f32 %v439, %v441
    %v443 = vadd.f32 %v439, %v442
    %vm444 = vweird.f32 %v275
    %vm445 = vweird.f32 %v439
    %vm446 = vmor %vm444, %vm445
    %v447 = vsel %vm446, %v439, %v443
    %v448 = vand.u32 2147483647, %v275
    %vm449 = vcmp.eq.f32.partialorder %v448, 8.507059e+37
    %v450 = vand.u32 %v275, 2147483648
    %v451 = vor.u32 1.1754944e-38, %v450
    %v452 = vsel %vm449, %v451, %v447
    %v453 = vmul.f32 %v318, %v354
    %v454 = vmul.f32 %v321, %v368
    %v455 = vmul.f32 %v324, %v382
    %v456 = vmul.f32 %v327, %v396
    %v457 = vmul.f32 %v330, %v410
    %v458 = vmul.f32 %v333, %v424
    %v459 = vmul.f32 %v336, %v438
    %v460 = vmul.f32 %v339, %v452
    %463 = vrot.lane.b32.xlu0 %v455, 8
    %v464 = vpop.permute.xlu0 %463
    %465 = vrot.lane.b32.xlu0 %v456, 8
    %v466 = vpop.permute.xlu0 %465
    %471 = vrot.lane.b32.xlu0 %v457, 16
    %v472 = vpop.permute.xlu0 %471
    %473 = vrot.lane.b32.xlu0 %v458, 16
    %v474 = vpop.permute.xlu0 %473
    %479 = vrot.lane.b32.xlu0 %v459, 24
    %v480 = vpop.permute.xlu0 %479
    %481 = vrot.lane.b32.xlu0 %v460, 24
    %v482 = vpop.permute.xlu0 %481
    %v485 = vsel %vm105, %v453, %v464
    %v486 = vsel %vm105, %v454, %v466
    %vm487 = vcmask 130048
    %v488 = vsel %vm487, %v485, %v472
    %v489 = vsel %vm487, %v486, %v474
    %vm490 = vcmask 195584
    %v491 = vsel %vm490, %v488, %v480
    %v492 = vsel %vm490, %v489, %v482
    %v493 = vld [vmem:[%s3] sm:$0xff]
    %v494 = vld [vmem:[%s3 + $0x8] sm:$0xff]
    %v495 = vld [vmem:[%s3 + $0x10] sm:$0xff]
    %v496 = vld [vmem:[%s3 + $0x18] sm:$0xff]
    %v497 = vperm.slane %v31, 0
    %v499 = vsel %vm39, %v491, 0
    %v502 = vsel %vm39, %v492, 0
    %504 = vmatpush.msra.mxu0 0.0
    %505 = vmatpush.msra.mxu0 0.0
    %506 = vmatpush.msra.mxu0 0.0
    %507 = vmatpush.msra.mxu0 0.0
    %508 = vmatpush.msra.mxu0 0.0
    %509 = vmatpush.msra.mxu0 0.0
    %510 = vmatpush.msra.mxu0 0.0
    %511 = vmatpush.msra.mxu0 0.0
    %512 = vmatpush.msra.mxu0 0.0
    %513 = vmatpush.msra.mxu0 0.0
    %514 = vmatpush.msra.mxu0 0.0
    %515 = vmatpush.msra.mxu0 0.0
    %516 = vmatpush.msra.mxu0 %v496
    %517 = vmatpush.msra.mxu0 %v495
    %518 = vmatpush.msra.mxu0 %v494
    %519 = vmatpush.msra.mxu0 %v493
    %520 = vmatmul.f32.gmra.mxu0 %v499
    %v521 = vpop.f32.mrf.mxu0
    %v522 = vadd.f32 %v497, %v521
    %523 = vmatmul.f32.gmra.mxu0 %v502
    %v524 = vpop.f32.mrf.mxu0
    %v525 = vadd.f32 %v497, %v524
    %526 = vdwg.mxu0
    %v527 = vadd.f32 %v24, %v522
    %v528 = vadd.f32 %v25, %v525
    %v529 = vsel %vm39, %v527, 0.0
    %530 = vadd.xlane.f32.xlu0 %v529
    %v531 = vpop.xlane.xlu0 %530
    %v532 = vsel %vm39, %v528, 0.0
    %533 = vadd.xlane.f32.xlu0 %v532
    %v534 = vpop.xlane.xlu0 %533
    %v535 = vrcp.pop 32.0
    %v536 = vmul.f32 32.0, %v535
    %v537 = vsub.f32 1.0, %v536
    %v538 = vmul.f32 %v535, %v537
    %v539 = vadd.f32 %v535, %v538
    %vm540 = vweird.f32 %v535
    %v541 = vsel %vm540, %v535, %v539
    %v542 = vmul.f32 %v531, %v541
    %v543 = vmul.f32 %v534, %v541
    %v544 = vsub.f32 %v527, %v542
    %v545 = vsub.f32 %v528, %v543
    %v546 = vmul.f32 %v544, %v544
    %v547 = vmul.f32 %v545, %v545
    %v548 = vsel %vm39, %v546, 0.0
    %549 = vadd.xlane.f32.xlu0 %v548
    %v550 = vpop.xlane.xlu0 %549
    %v551 = vsel %vm39, %v547, 0.0
    %552 = vadd.xlane.f32.xlu0 %v551
    %v553 = vpop.xlane.xlu0 %552
    %v554 = vmul.f32 %v550, %v541
    %v555 = vmul.f32 %v553, %v541
    %v556 = vadd.f32 %v554, 1e-06
    %v557 = vadd.f32 %v555, 1e-06
    %v558 = vrsqrt.pop %v556
    %v559 = vmul.f32 %v558, %v556
    %v560 = vmul.f32 %v559, %v558
    %v561 = vmul.f32 0.5, %v560
    %v562 = vsub.f32 1.5, %v561
    %v563 = vmul.f32 %v558, %v562
    %vm564 = vweird.f32 %v556
    %vm565 = vweird.f32 %v558
    %vm566 = vmor %vm564, %vm565
    %v567 = vsel %vm566, %v558, %v563
    %v568 = vrsqrt.pop %v557
    %v569 = vmul.f32 %v568, %v557
    %v570 = vmul.f32 %v569, %v568
    %v571 = vmul.f32 0.5, %v570
    %v572 = vsub.f32 1.5, %v571
    %v573 = vmul.f32 %v568, %v572
    %vm574 = vweird.f32 %v557
    %vm575 = vweird.f32 %v568
    %vm576 = vmor %vm574, %vm575
    %v577 = vsel %vm576, %v568, %v573
    %v578 = vmul.f32 %v544, %v567
    %v579 = vmul.f32 %v545, %v577
    %v580 = vperm.slane %v34, 0
    %v581 = vmul.f32 %v578, %v580
    %v582 = vmul.f32 %v579, %v580
    %v583 = vperm.slane %v35, 0
    %v584 = vadd.f32 %v581, %v583
    %v585 = vadd.f32 %v582, %v583
    %v586 = vperm.slane %v32, 0
    %591 = vrot.lane.b32.xlu0 %v26, 64
    %v592 = vpop.permute.xlu0 %591
    %593 = vrot.lane.b32.xlu0 %v27, 64
    %v594 = vpop.permute.xlu0 %593
    %595 = vrot.lane.b32.xlu0 %v28, 64
    %v596 = vpop.permute.xlu0 %595
    %597 = vrot.lane.b32.xlu0 %v29, 64
    %v598 = vpop.permute.xlu0 %597
    %v604 = vsel %vm39, %v584, 0
    %v607 = vsel %vm39, %v585, 0
    %609 = vmatpush.msra.mxu0 0.0
    %610 = vmatpush.msra.mxu0 0.0
    %611 = vmatpush.msra.mxu0 0.0
    %612 = vmatpush.msra.mxu0 0.0
    %613 = vmatpush.msra.mxu0 0.0
    %614 = vmatpush.msra.mxu0 0.0
    %615 = vmatpush.msra.mxu0 0.0
    %616 = vmatpush.msra.mxu0 0.0
    %617 = vmatpush.msra.mxu0 0.0
    %618 = vmatpush.msra.mxu0 0.0
    %619 = vmatpush.msra.mxu0 0.0
    %620 = vmatpush.msra.mxu0 0.0
    %621 = vmatpush.msra.mxu0 %v598
    %622 = vmatpush.msra.mxu0 %v596
    %623 = vmatpush.msra.mxu0 %v594
    %624 = vmatpush.msra.mxu0 %v592
    %625 = vmatmul.f32.gmra.mxu0 %v604
    %v626 = vpop.f32.mrf.mxu0
    %v627 = vadd.f32 %v586, %v626
    %628 = vmatmul.f32.gmra.mxu0 %v607
    %v629 = vpop.f32.mrf.mxu0
    %v630 = vadd.f32 %v586, %v629
    %631 = vdwg.mxu0
    %v632 = vmax.f32 %v627, 0.0
    %v633 = vmax.f32 %v630, 0.0
    %v634 = vld [vmem:[%s4] sm:$0xff]
    %v635 = vld [vmem:[%s4 + $0x8] sm:$0xff]
    %v636 = vld [vmem:[%s4 + $0x10] sm:$0xff]
    %v637 = vld [vmem:[%s4 + $0x18] sm:$0xff]
    %v638 = vld [vmem:[%s4 + $0x20] sm:$0xff]
    %v639 = vld [vmem:[%s4 + $0x28] sm:$0xff]
    %v640 = vld [vmem:[%s4 + $0x30] sm:$0xff]
    %v641 = vld [vmem:[%s4 + $0x38] sm:$0xff]
    %v642 = vperm.slane %v33, 0
    %v644 = vsel %vm203, %v632, 0
    %v647 = vsel %vm203, %v633, 0
    %649 = vmatpush.msra.mxu0 0.0
    %650 = vmatpush.msra.mxu0 0.0
    %651 = vmatpush.msra.mxu0 0.0
    %652 = vmatpush.msra.mxu0 0.0
    %653 = vmatpush.msra.mxu0 0.0
    %654 = vmatpush.msra.mxu0 0.0
    %655 = vmatpush.msra.mxu0 0.0
    %656 = vmatpush.msra.mxu0 0.0
    %657 = vmatpush.msra.mxu0 %v641
    %658 = vmatpush.msra.mxu0 %v640
    %659 = vmatpush.msra.mxu0 %v639
    %660 = vmatpush.msra.mxu0 %v638
    %661 = vmatpush.msra.mxu0 %v637
    %662 = vmatpush.msra.mxu0 %v636
    %663 = vmatpush.msra.mxu0 %v635
    %664 = vmatpush.msra.mxu0 %v634
    %665 = vmatmul.f32.gmra.mxu0 %v644
    %v666 = vpop.f32.mrf.mxu0
    %v667 = vadd.f32 %v642, %v666
    %668 = vmatmul.f32.gmra.mxu0 %v647
    %v669 = vpop.f32.mrf.mxu0
    %v670 = vadd.f32 %v642, %v669
    %671 = vdwg.mxu0
    %v672 = vadd.f32 %v584, %v667
    %v673 = vadd.f32 %v585, %v670
    %v674 = vsel %vm39, %v672, 0.0
    %675 = vadd.xlane.f32.xlu0 %v674
    %v676 = vpop.xlane.xlu0 %675
    %v677 = vsel %vm39, %v673, 0.0
    %678 = vadd.xlane.f32.xlu0 %v677
    %v679 = vpop.xlane.xlu0 %678
    %v680 = vmul.f32 %v676, %v541
    %v681 = vmul.f32 %v679, %v541
    %v682 = vsub.f32 %v672, %v680
    %v683 = vsub.f32 %v673, %v681
    %v684 = vmul.f32 %v682, %v682
    %v685 = vmul.f32 %v683, %v683
    %v686 = vsel %vm39, %v684, 0.0
    %687 = vadd.xlane.f32.xlu0 %v686
    %v688 = vpop.xlane.xlu0 %687
    %v689 = vsel %vm39, %v685, 0.0
    %690 = vadd.xlane.f32.xlu0 %v689
    %v691 = vpop.xlane.xlu0 %690
    %v692 = vmul.f32 %v688, %v541
    %v693 = vmul.f32 %v691, %v541
    %v694 = vadd.f32 %v692, 1e-06
    %v695 = vadd.f32 %v693, 1e-06
    %v696 = vrsqrt.pop %v694
    %v697 = vmul.f32 %v696, %v694
    %v698 = vmul.f32 %v697, %v696
    %v699 = vmul.f32 0.5, %v698
    %v700 = vsub.f32 1.5, %v699
    %v701 = vmul.f32 %v696, %v700
    %vm702 = vweird.f32 %v694
    %vm703 = vweird.f32 %v696
    %vm704 = vmor %vm702, %vm703
    %v705 = vsel %vm704, %v696, %v701
    %v706 = vrsqrt.pop %v695
    %v707 = vmul.f32 %v706, %v695
    %v708 = vmul.f32 %v707, %v706
    %v709 = vmul.f32 0.5, %v708
    %v710 = vsub.f32 1.5, %v709
    %v711 = vmul.f32 %v706, %v710
    %vm712 = vweird.f32 %v695
    %vm713 = vweird.f32 %v706
    %vm714 = vmor %vm712, %vm713
    %v715 = vsel %vm714, %v706, %v711
    %v716 = vmul.f32 %v682, %v705
    %v717 = vmul.f32 %v683, %v715
    %v718 = vperm.slane %v36, 0
    %v719 = vmul.f32 %v716, %v718
    %v720 = vmul.f32 %v717, %v718
    %v721 = vperm.slane %v37, 0
    %v722 = vadd.f32 %v719, %v721
    %v723 = vadd.f32 %v720, %v721
    %724 = vst.msk [vmem:[#allocation2] sm:$0xff] %vm39, %v722
    %725 = vst.msk [vmem:[#allocation2 + $0x8] sm:$0xff] %vm39, %v723
    // Predicated region
    $region26: #{encoder_layer.1} parent=1 // pred_check
      _
    $region27: #{encoder_layer.1} parent=1 // pred_check_branch
      %727 = sbr.rel (0) target = $region29
    $region28: #{encoder_layer.1} parent=1 // pred_region
      %729 = vsyncadd [#allocation3], 0
      %s730 = sshll.u32 [#allocation2], 4
      %s731 = int_to_ptr.vmem [resolvable:$true] %s730
      %s732 = sshll.u32 %s6, 4
      %s733 = int_to_ptr.hbm [resolvable:$true] %s732
      %738 = dma.vmem_to_hbm [thread:$0]  %s731, 256, %s733, [#allocation3], 128, 128, 8
    $region29: #{encoder_layer.1} parent=1 // pred_fallthru
      _
    // Predicated region
    $region30: #{encoder_layer.1} parent=1 // pred_check
      _
    $region31: #{encoder_layer.1} parent=1 // pred_check_branch
      %740 = sbr.rel (0) target = $region33
    $region32: #{encoder_layer.1} parent=1 // pred_region
      %742 = dma.done [#allocation3], 256
    $region33: #{encoder_layer.1} parent=1 // pred_fallthru
      _
    %743 = vsyncpa [#allocation3], 1

</llo_original>
